<compile_context>
chip_gen: v5e
topology: v5e:2x2
jax: 0.10.0
libtpu: 0.0.40
codegen_flags: <defaults>
</compile_context>

<pallas_src>
import math
import jax
import jax.numpy as jnp
from jax.experimental import pallas as pl
from jax.experimental.pallas import tpu as pltpu

_LANES = 128


def _round_up(v, m):
    return ((v + m - 1) // m) * m


# --------------------------------------------------------------------------
# Kernels
# --------------------------------------------------------------------------
def _linear_kernel(x_ref, wt_ref, b_ref, o_ref):
    # x: (TN, C), wt: (C, Kp) [resident], b: (1, Kp) f32, o: (TN, Kp)
    acc = jnp.dot(x_ref[...], wt_ref[...], preferred_element_type=jnp.float32)
    o_ref[...] = (acc + b_ref[...]).astype(o_ref.dtype)


def _linear_kernel_acc(x_ref, wt_ref, b_ref, o_ref, acc_ref):
    # C-chunked variant: grid = (row_tiles, c_chunks); axis 1 is the reduction.
    k = pl.program_id(1)

    @pl.when(k == 0)
    def _init():
        acc_ref[...] = jnp.zeros_like(acc_ref)

    acc_ref[...] += jnp.dot(
        x_ref[...], wt_ref[...], preferred_element_type=jnp.float32
    )

    @pl.when(k == pl.num_programs(1) - 1)
    def _finalize():
        o_ref[...] = (acc_ref[...] + b_ref[...]).astype(o_ref.dtype)


# --------------------------------------------------------------------------
# Tiling / budgeting helpers
# --------------------------------------------------------------------------
def _vmem_budget_bytes():
    """Chip-derived VMEM budget + explicit scoped limit to pass to Mosaic."""
    cap = 64 << 20  # conservative fallback if hardware query is unavailable
    try:
        info = pltpu.get_tpu_info()
        cap = int(getattr(info, "vmem_capacity_bytes", cap))
    except Exception:
        pass
    # ~28 MiB on v7x (64 MiB/TC), 48 MiB on v5e/v6e (128 MiB).
    budget = min(int(cap * 0.45), 48 << 20)
    # Scoped limit: budget + headroom for Mosaic internal scratch.
    limit = int(min(int(cap * 0.75), budget + (16 << 20)))
    return budget, limit


def _best_tile_n(n_cap, c_block, kp, itemsize, sublane, budget, with_acc):
    """Largest row tile whose per-step VMEM footprint fits the budget."""
    c_lanes = _round_up(max(c_block, 1), _LANES)
    c_sub = _round_up(max(c_block, 1), sublane)
    w_bytes = 2 * c_sub * kp * itemsize      # weight tile (worst-case double buffer)
    b_bytes = 2 * sublane * kp * 4           # f32 bias (tiny)
    for cand in (8192, 4096, 2048, 1024, 512, 256, 128, 64, 32, 16, 8):
        tile = min(cand, n_cap)
        if tile % sublane != 0:
            continue
        x_bytes = 2 * tile * c_lanes * itemsize   # double-buffered streamed x tile
        o_bytes = 2 * tile * kp * itemsize        # double-buffered output tile
        a_bytes = tile * kp * 4 if with_acc else 0
        if x_bytes + o_bytes + w_bytes + b_bytes + a_bytes <= budget:
            return tile
    return None


def _plan_tiles(n, c, kp, itemsize, sublane, budget, tile_c=None):
    """Returns (tile_n, tile_c_or_None). tile_c=None => fully resident weight."""
    n_cap = _round_up(max(n, 1), sublane)
    if tile_c is not None:  # caller-forced C chunking (testing / very large C)
        tc = _round_up(tile_c, _LANES)
        tn = _best_tile_n(n_cap, tc, kp, itemsize, sublane, budget, with_acc=True)
        return (tn or sublane), tc

    # Prefer a fully resident (C, Kp) weight — no reduction axis.
    tn_full = _best_tile_n(n_cap, c, kp, itemsize, sublane, budget, with_acc=False)
    if tn_full is not None and (tn_full >= 256 or tn_full >= n_cap):
        return tn_full, None
    if c <= 512:  # chunking C cannot help when C is already small
        return (tn_full or sublane), None

    # Large in_channels squeezed the row tile: split C over an "arbitrary"
    # reduction axis so row tiles stay >= 256.
    for tc in (2048, 1024, 512, 256, 128):
        if tc >= c:
            continue
        tn = _best_tile_n(n_cap, tc, kp, itemsize, sublane, budget, with_acc=True)
        if tn is not None and (tn >= 256 or tn >= n_cap):
            return tn, tc
    return (tn_full or sublane), None


# --------------------------------------------------------------------------
# Parameter prep (hoisted out of the per-call path) + forward
# --------------------------------------------------------------------------
def prepare_params(weight, bias):
    """One-time layout prep: weight (K, C) -> W^T lane-padded to (C, Kp);
    bias -> (1, Kp) pre-cast to f32. Do this at init time / cache the result."""
    K, C = weight.shape
    Kp = _round_up(K, _LANES)
    wt = jnp.zeros((C, Kp), dtype=weight.dtype).at[:, :K].set(weight.T)
    b2 = jnp.zeros((1, Kp), dtype=jnp.float32).at[0, :K].set(
        bias.astype(jnp.float32).reshape(-1)
    )
    return wt, b2


def log_regression_forward(x, wt, b2, num_classes, *, use_pallas=None, tile_c=None):
    """y = x @ weight.T + bias, with wt/b2 from prepare_params()."""
    N, C = x.shape
    C2, Kp = wt.shape
    assert C == C2, "weight in_channels mismatch"
    K = int(num_classes)
    assert K <= Kp

    itemsize = jnp.dtype(x.dtype).itemsize
    sublane = {1: 32, 2: 16}.get(itemsize, 8)

    # Small-problem fast path: Pallas custom-call + per-step overhead dwarfs
    # the few Kflops of a tiny linear layer; a plain XLA fusion is faster.
    total_bytes = itemsize * (N * C + C * Kp + N * Kp)
    if use_pallas is None:
        use_pallas = total_bytes >= (256 << 10)
    if not use_pallas:
        y = jnp.dot(
            x, wt[:, :K],
            preferred_element_type=jnp.float32,
            precision=jax.lax.Precision.HIGHEST,
        )
        return (y + b2[0, :K]).astype(x.dtype)

    budget, vmem_limit = _vmem_budget_bytes()
    tile_n, tc = _plan_tiles(N, C, Kp, itemsize, sublane, budget, tile_c)

    # Keep >= 2 grid row-steps so the "parallel" batch axis can shard across
    # v7x's two TensorCores (one step would leave a TC idle).
    if N > sublane:
        half = _round_up((N + 1) // 2, sublane)
        tile_n = min(tile_n, half)

    Np = _round_up(N, tile_n)
    x_p = x if Np == N else jnp.pad(x, ((0, Np - N), (0, 0)))

    if tc is None:
        grid = (Np // tile_n,)
        in_specs = [
            pl.BlockSpec((tile_n, C), lambda i: (i, 0)),  # streamed x row tile
            pl.BlockSpec((C, Kp), lambda i: (0, 0)),      # resident W^T (constant idx -> fetched once)
            pl.BlockSpec((1, Kp), lambda i: (0, 0)),      # resident f32 bias
        ]
        out_specs = pl.BlockSpec((tile_n, Kp), lambda i: (i, 0))
        scratch = []
        kernel = _linear_kernel
        dims = ("parallel",)
    else:
        Cp = _round_up(C, tc)
        if Cp != C:
            # TODO(synk): for production large-C use, pre-pad x/wt at prep time.
            x_p = jnp.pad(x_p, ((0, 0), (0, Cp - C)))
            wt = jnp.pad(wt, ((0, Cp - C), (0, 0)))
        grid = (Np // tile_n, Cp // tc)
        in_specs = [
            pl.BlockSpec((tile_n, tc), lambda i, k: (i, k)),
            pl.BlockSpec((tc, Kp), lambda i, k: (k, 0)),
            pl.BlockSpec((1, Kp), lambda i, k: (0, 0)),
        ]
        out_specs = pl.BlockSpec((tile_n, Kp), lambda i, k: (i, 0))
        scratch = [pltpu.VMEM((tile_n, Kp), jnp.float32)]
        kernel = _linear_kernel_acc
        dims = ("parallel", "arbitrary")

    w_itemsize = jnp.dtype(wt.dtype).itemsize
    cost = pl.CostEstimate(
        flops=2 * Np * C * Kp,
        transcendentals=0,
        # Padded traffic actually generated: Np*C reads, Np*Kp writes, C*Kp weight.
        bytes_accessed=itemsize * (Np * C + Np * Kp) + w_itemsize * C * Kp + 4 * Kp,
    )

    out = pl.pallas_call(
        kernel,
        out_shape=jax.ShapeDtypeStruct((Np, Kp), x.dtype),
        grid_spec=pltpu.PrefetchScalarGridSpec(
            num_scalar_prefetch=0,
            grid=grid,
            in_specs=in_specs,
            out_specs=out_specs,
            scratch_shapes=scratch,
        ),
        compiler_params=pltpu.CompilerParams(
            dimension_semantics=dims,
            vmem_limit_bytes=vmem_limit,
        ),
        cost_estimate=cost,
    )(x_p, wt, b2)

    # Slice off batch-row padding and class-lane padding.
    return out[:N, :K]


def log_regression_apply(x, weight, bias, **kw):
    """Convenience one-shot wrapper matching torch.nn.Linear semantics."""
    wt, b2 = prepare_params(weight, bias)
    return log_regression_forward(x, wt, b2, weight.shape[0], **kw)


def init_params(key, in_channels, num_classes, dtype=jnp.float32):
    # Xavier-uniform weight (matches torch.nn.init.xavier_uniform_), zero bias.
    limit = math.sqrt(6.0 / (in_channels + num_classes))
    w_key, _ = jax.random.split(key)
    weight = jax.random.uniform(
        w_key, (num_classes, in_channels), minval=-limit, maxval=limit, dtype=dtype
    )
    bias = jnp.zeros((num_classes,), dtype=dtype)
    return weight, bias


if __name__ == "__main__":
    key = jax.random.PRNGKey(0)
    k_x, k_p, k_x2, k_p2 = jax.random.split(key, 4)

    # Shapes implied by the module: x (batch, in_channels) -> (batch, num_classes)
    batch, in_channels, num_classes = 16, 32, 8
    x = jax.random.normal(k_x, (batch, in_channels), dtype=jnp.float32)
    weight, bias = init_params(k_p, in_channels, num_classes)
    wt, b2 = prepare_params(weight, bias)   # one-time layout prep

    ref = jnp.dot(x, weight.T, precision=jax.lax.Precision.HIGHEST) + bias

    # 1) Tiny default shapes -> small-problem fast path (auto-selected).
    y_fast = jax.block_until_ready(log_regression_forward(x, wt, b2, num_classes))
    assert y_fast.shape == (batch, num_classes)
    assert jnp.allclose(y_fast, ref, atol=1e-4, rtol=1e-4)

    # 2) Same problem forced through the Pallas kernel (resident-weight path).
    y_pl = jax.block_until_ready(
        log_regression_forward(x, wt, b2, num_classes, use_pallas=True)
    )
    assert y_pl.shape == (batch, num_classes)
    assert jnp.allclose(y_pl, ref, atol=1e-3, rtol=1e-3)

    # 3) Exercise the C-reduction ("arbitrary") axis + f32 accumulator path.
    b3, c3, k3 = 64, 256, 8
    x3 = jax.random.normal(k_x2, (b3, c3), dtype=jnp.float32)
    w3, bias3 = init_params(k_p2, c3, k3)
    wt3, b23 = prepare_params(w3, bias3)
    y3 = jax.block_until_ready(
        log_regression_forward(x3, wt3, b23, k3, use_pallas=True, tile_c=128)
    )
    ref3 = jnp.dot(x3, w3.T, precision=jax.lax.Precision.HIGHEST) + bias3
    assert y3.shape == (b3, k3)
    assert jnp.allclose(y3, ref3, atol=1e-3, rtol=1e-3)

    print("KERNEL_OK")
</pallas_src>

<mosaic_0001>
module attributes {stable_mosaic.version = 11 : i64} {
  func.func @_linear_kernel(%arg0: i32, %arg1: memref<8x32xf32, #tpu.memory_space<vmem>>, %arg2: memref<32x128xf32, #tpu.memory_space<vmem>>, %arg3: memref<1x128xf32, #tpu.memory_space<vmem>>, %arg4: memref<8x128xf32, #tpu.memory_space<vmem>>) attributes {dimension_semantics = [#tpu.dimension_semantics<parallel>], iteration_bounds = array<i64: 2>, scalar_prefetch = 0 : i64, scratch_operands = 0 : i64, tpu.core_type = #tpu.core_type<tc>, window_params = [{transform_indices = @transform_0, window_bounds = array<i64: 8, 32>}, {pipeline_mode = #tpu.pipeline_mode<synchronous>, transform_indices = @transform_1, window_bounds = array<i64: 32, 128>}, {pipeline_mode = #tpu.pipeline_mode<synchronous>, transform_indices = @transform_2, window_bounds = array<i64: 1, 128>}, {transform_indices = @transform_3, window_bounds = array<i64: 8, 128>}]} {
    %c0 = arith.constant 0 : index
    %c0_0 = arith.constant 0 : index
    %0 = vector.load %arg1[%c0, %c0_0] : memref<8x32xf32, #tpu.memory_space<vmem>>, vector<8x32xf32>
    %c0_1 = arith.constant 0 : index
    %c0_2 = arith.constant 0 : index
    %1 = vector.load %arg2[%c0_1, %c0_2] : memref<32x128xf32, #tpu.memory_space<vmem>>, vector<32x128xf32>
    %cst = arith.constant dense<0.000000e+00> : vector<8x128xf32>
    %2 = tpu.matmul %0, %1, %cst {dimension_numbers = #tpu.dot_dimension_numbers<[1], [0], [0], [1], [0, 0, 1, 1], [], []>} : vector<8x32xf32>, vector<32x128xf32>, vector<8x128xf32> -> vector<8x128xf32>
    %c0_3 = arith.constant 0 : index
    %c0_4 = arith.constant 0 : index
    %3 = vector.load %arg3[%c0_3, %c0_4] : memref<1x128xf32, #tpu.memory_space<vmem>>, vector<1x128xf32>
    %4 = vector.broadcast %3 : vector<1x128xf32> to vector<8x128xf32>
    %5 = arith.addf %2, %4 : vector<8x128xf32>
    %c0_5 = arith.constant 0 : index
    %c0_6 = arith.constant 0 : index
    %6 = vector.load %arg4[%c0_5, %c0_6] : memref<8x128xf32, #tpu.memory_space<vmem>>, vector<8x128xf32>
    tpu.vector_store %arg4[%c0_5, %c0_6], %5 {strides = array<i32>} : memref<8x128xf32, #tpu.memory_space<vmem>>, vector<8x128xf32>,
    return
  }
  func.func @transform_0(%arg0: i32) -> (i32, i32) {
    %c0_i32 = arith.constant 0 : i32
    %c0_i32_0 = arith.constant 0 : i32
    return %arg0, %c0_i32 : i32, i32
  }
  func.func @transform_1(%arg0: i32) -> (i32, i32) {
    %c0_i32 = arith.constant 0 : i32
    %c0_i32_0 = arith.constant 0 : i32
    %c0_i32_1 = arith.constant 0 : i32
    return %c0_i32, %c0_i32_0 : i32, i32
  }
  func.func @transform_2(%arg0: i32) -> (i32, i32) {
    %c0_i32 = arith.constant 0 : i32
    %c0_i32_0 = arith.constant 0 : i32
    %c0_i32_1 = arith.constant 0 : i32
    return %c0_i32, %c0_i32_0 : i32, i32
  }
  func.func @transform_3(%arg0: i32) -> (i32, i32) {
    %c0_i32 = arith.constant 0 : i32
    %c0_i32_0 = arith.constant 0 : i32
    return %arg0, %c0_i32 : i32, i32
  }
}

</mosaic_0001>

<llo_original>
// kernel: tpu_custom_call.1
$region0: #{tpu_custom_call.1}
  #allocation0 [shape = 'u32[]', space=smem, size = 0x4, offset = 0x4, fixed_abs, tag = 'smem constant byte address 0x4 - core index']
  #allocation1 [shape = 'u32[72,128]{1,0:T(1,128)}', space=vmem, size = 0x9000, scoped, tag = 'internal scratch']
  %s0 = inlined_call_operand.hbm [shape: f32[16,32], index: 0, kind: input, shape index: {}]
  %s1 = inlined_call_operand.hbm [shape: f32[32,128], index: 1, kind: input, shape index: {}]
  %s2 = inlined_call_operand.vmem [shape: f32[1,128], index: 2, kind: input, shape index: {}]
  %s3 = inlined_call_operand.hbm [shape: f32[16,128], index: 3, kind: output, shape index: {}]
  %s4 = sld [smem:[#allocation0]]
  $region53: #{tpu_custom_call.1} parent=0
    _
  %s6 = ssub.s32 1, %s4
  %s7 = scalar_select 0, %s6, %s4
  $region1: #{tpu_custom_call.1} parent=0
    #allocation2 [shape = 'u8[8192]{0}', space=vmem, size = 0x2000, scoped, tag = 'input window, operand 0']
    #allocation3 [shape = 's32[2]{0}', space=sflag, size = 0x8, scoped, tag = 'scoped memory for tpu_custom_call.1']
    #allocation4 [shape = 's32[2]{0}', space=sflag, size = 0x8, scoped, tag = 'scoped memory for tpu_custom_call.1']
    #allocation5 [shape = 'u8[16384]{0}', space=vmem, size = 0x4000, scoped, tag = 'input window, operand 1, single buffered']
    #allocation6 [shape = 's32[1]{0}', space=sflag, size = 0x4, scoped, tag = 'scoped memory for tpu_custom_call.1']
    #allocation7 [shape = 'u8[8192]{0}', space=vmem, size = 0x2000, scoped, tag = 'output window, operand 0']
    %8 = vsyncpa [#allocation3], 0
    %s9 = scalar_lea.sflag [#allocation3], 1
    %10 = vsyncpa %s9, 0
    %11 = vsyncpa [#allocation6], 0
    %12 = vsyncpa [#allocation4], 0
    %s13 = scalar_lea.sflag [#allocation4], 1
    %14 = vsyncpa %s13, 0
    loop: start=0, step=1, limit=4
    $region2: #{tpu_custom_call.1} parent=1 // loop_pre_header
      _
    $region3: #{tpu_custom_call.1} parent=1 // loop_header
      %s16 = sphi 0, %s20
      %p17 = scmp.ge.s32.totalorder %s16, 4
      %s26 = sphi 0, %s28
      %s29 = sphi 0, %s26
      %s30 = sphi 0, %s29
      %s46 = sphi 0, %s30
      %s50 = sphi 0, %s50
      %s52 = sphi 0, %s50
      %s53 = sphi 0, %s52
      %s67 = sphi 0, %s53
      %s71 = sphi 0, %s71
      %s73 = sphi 0, %s71
      %s74 = sphi 0, %s73
      %s88 = sphi 0, %s74
      %s94 = sphi 0, %s96
      %s97 = sphi 0, %s94
      %s98 = sphi 0, %s97
      %s114 = sphi 0, %s98
    $region4: #{tpu_custom_call.1} parent=1 // loop_header_branch
      %19 = sbr.rel (%p17) target = $region8
    $region5: #{tpu_custom_call.1} parent=1 // loop_body
      %s21 = ssub.s32 %s16, 1
      %s22 = ssub.s32 %s16, 2
      %s23 = sadd.s32 %s16, 1
      %s24 = ssub.s32 %s16, %s23
      %p25 = scmp.eq.s32.totalorder %s24, 0
      %s27 = sadd.s32 %s26, 1
      %s28 = scalar_select %p25, %s26, %s27
      %p31 = pneg %p25
      %p32 = scmp.eq.s32.totalorder %s16, 1
      %p33 = por %p31, %p32
      %p34 = scmp.ne.s32.totalorder %s26, %s29
      %p35 = scmp.eq.s32.totalorder %s16, 0
      %p36 = por %p34, %p35
      %p37 = scmp.ne.s32.totalorder %s26, %s29
      %p38 = scmp.eq.s32.totalorder %s21, 1
      %p39 = por %p37, %p38
      %p40 = scmp.ne.s32.totalorder %s29, %s30
      %p41 = scmp.eq.s32.totalorder %s21, 0
      %p42 = por %p40, %p41
      %p43 = scmp.ne.s32.totalorder %s29, %s30
      %p44 = scmp.eq.s32.totalorder %s22, 1
      %p45 = por %p43, %p44
      %p47 = scmp.ne.s32.totalorder %s30, %s46
      %p48 = scmp.eq.s32.totalorder %s22, 0
      %p49 = por %p47, %p48
      %s51 = sadd.s32 %s50, 1
      %p54 = scmp.eq.s32.totalorder %s16, 1
      %p55 = scmp.ne.s32.totalorder %s50, %s52
      %p56 = scmp.eq.s32.totalorder %s16, 0
      %p57 = por %p55, %p56
      %p58 = scmp.ne.s32.totalorder %s50, %s52
      %p59 = scmp.eq.s32.totalorder %s21, 1
      %p60 = por %p58, %p59
      %p61 = scmp.ne.s32.totalorder %s52, %s53
      %p62 = scmp.eq.s32.totalorder %s21, 0
      %p63 = por %p61, %p62
      %p64 = scmp.ne.s32.totalorder %s52, %s53
      %p65 = scmp.eq.s32.totalorder %s22, 1
      %p66 = por %p64, %p65
      %p68 = scmp.ne.s32.totalorder %s53, %s67
      %p69 = scmp.eq.s32.totalorder %s22, 0
      %p70 = por %p68, %p69
      %s72 = sadd.s32 %s71, 1
      %p75 = scmp.eq.s32.totalorder %s16, 1
      %p76 = scmp.ne.s32.totalorder %s71, %s73
      %p77 = scmp.eq.s32.totalorder %s16, 0
      %p78 = por %p76, %p77
      %p79 = scmp.ne.s32.totalorder %s71, %s73
      %p80 = scmp.eq.s32.totalorder %s21, 1
      %p81 = por %p79, %p80
      %p82 = scmp.ne.s32.totalorder %s73, %s74
      %p83 = scmp.eq.s32.totalorder %s21, 0
      %p84 = por %p82, %p83
      %p85 = scmp.ne.s32.totalorder %s73, %s74
      %p86 = scmp.eq.s32.totalorder %s22, 1
      %p87 = por %p85, %p86
      %p89 = scmp.ne.s32.totalorder %s74, %s88
      %p90 = scmp.eq.s32.totalorder %s22, 0
      %p91 = por %p89, %p90
      %s92 = ssub.s32 %s16, %s23
      %p93 = scmp.eq.s32.totalorder %s92, 0
      %s95 = sadd.s32 %s94, 1
      %s96 = scalar_select %p93, %s94, %s95
      %p99 = pneg %p93
      %p100 = scmp.eq.s32.totalorder %s16, 1
      %p101 = por %p99, %p100
      %p102 = scmp.ne.s32.totalorder %s94, %s97
      %p103 = scmp.eq.s32.totalorder %s16, 0
      %p104 = por %p102, %p103
      %p105 = scmp.ne.s32.totalorder %s94, %s97
      %p106 = scmp.eq.s32.totalorder %s21, 1
      %p107 = por %p105, %p106
      %p108 = scmp.ne.s32.totalorder %s97, %s98
      %p109 = scmp.eq.s32.totalorder %s21, 0
      %p110 = por %p108, %p109
      %p111 = scmp.ne.s32.totalorder %s97, %s98
      %p112 = scmp.eq.s32.totalorder %s22, 1
      %p113 = por %p111, %p112
      %p115 = scmp.ne.s32.totalorder %s98, %s114
      %p116 = scmp.eq.s32.totalorder %s22, 0
      %p117 = por %p115, %p116
      %p118 = scmp.le.s32.totalorder 1, %s16
      %p119 = scmp.lt.s32.totalorder %s16, 3
      %p120 = pnand %p118, %p119
      %p121 = pneg %p120
      // Predicated region
      $region9: #{tpu_custom_call.1} parent=5 // pred_check
        _
      $region10: #{tpu_custom_call.1} parent=5 // pred_check_branch
        %123 = sbr.rel (%p120) target = $region12
      $region11: #{tpu_custom_call.1} parent=5 // pred_region
        %s124 = ssub.s32 %s16, 1
        // Predicated region
        $region13: #{tpu_custom_call.1} parent=11 // pred_check
          %p125 = pneg %p63
        $region14: #{tpu_custom_call.1} parent=11 // pred_check_branch
          %127 = sbr.rel (%p125) target = $region16
        $region15: #{tpu_custom_call.1} parent=11 // pred_region
          %129 = vsyncadd [#allocation6], 0
          %s130 = sshll.u32 %s1, 4
          %s131 = int_to_ptr.hbm [resolvable:$true] %s130
          %s132 = sshll.u32 [#allocation5], 4
          %s133 = int_to_ptr.vmem [resolvable:$true] %s132
          %138 = dma.hbm_to_vmem [thread:$0]  %s131, 512, %s133, [#allocation6], 128, 128, 8
        $region16: #{tpu_custom_call.1} parent=11 // pred_fallthru
          _
        // Predicated region
        $region17: #{tpu_custom_call.1} parent=11 // pred_check
          %p139 = pneg %p84
        $region18: #{tpu_custom_call.1} parent=11 // pred_check_branch
          %141 = sbr.rel (%p139) target = $region20
        $region19: #{tpu_custom_call.1} parent=11 // pred_region
          _
        $region20: #{tpu_custom_call.1} parent=11 // pred_fallthru
          _
      $region12: #{tpu_custom_call.1} parent=5 // pred_fallthru
        _
      %p142 = scmp.lt.s32.totalorder %s16, 2
      // Predicated region
      $region21: #{tpu_custom_call.1} parent=5 // pred_check
        %p143 = pneg %p142
      $region22: #{tpu_custom_call.1} parent=5 // pred_check_branch
        %145 = sbr.rel (%p143) target = $region24
      $region23: #{tpu_custom_call.1} parent=5 // pred_region
        // Predicated region
        $region25: #{tpu_custom_call.1} parent=23 // pred_check
          %p146 = pneg %p36
        $region26: #{tpu_custom_call.1} parent=23 // pred_check_branch
          %148 = sbr.rel (%p146) target = $region28
        $region27: #{tpu_custom_call.1} parent=23 // pred_region
          %s149 = sand.u32 %s26, 1
          %s150 = scalar_lea.sflag [#allocation3], %s149
          %s151 = sand.u32 %s26, 1
          %s152 = smul.addr %s151, 8
          %s153 = scalar_lea.vmem [#allocation2], %s152
          %155 = vsyncadd %s150, 0
          %s156 = smul.addr %s16, 8
          %s157 = scalar_lea.hbm %s0, %s156
          %s159 = sshll.u32 %s157, 4
          %s160 = int_to_ptr.hbm [resolvable:$true] %s159
          %s161 = sshll.u32 %s153, 4
          %s162 = int_to_ptr.vmem [resolvable:$true] %s161
          %164 = dma.hbm_to_vmem [thread:$0]  %s160, 128, %s162, %s150
        $region28: #{tpu_custom_call.1} parent=23 // pred_fallthru
          _
      $region24: #{tpu_custom_call.1} parent=5 // pred_fallthru
        _
      %p165 = scmp.le.s32.totalorder 1, %s16
      %p166 = scmp.lt.s32.totalorder %s16, 3
      %p167 = pnand %p165, %p166
      %p168 = pneg %p167
      // Predicated region
      $region29: #{tpu_custom_call.1} parent=5 // pred_check
        _
      $region30: #{tpu_custom_call.1} parent=5 // pred_check_branch
        %170 = sbr.rel (%p167) target = $region32
      $region31: #{tpu_custom_call.1} parent=5 // pred_region
        %s171 = ssub.s32 %s16, 1
        %s172 = sand.u32 %s29, 1
        %s173 = scalar_lea.sflag [#allocation3], %s172
        %s174 = sand.u32 %s29, 1
        %s175 = smul.addr %s174, 8
        %s176 = scalar_lea.vmem [#allocation2], %s175
        // Predicated region
        $region33: #{tpu_custom_call.1} parent=31 // pred_check
          %p177 = pneg %p42
        $region34: #{tpu_custom_call.1} parent=31 // pred_check_branch
          %179 = sbr.rel (%p177) target = $region36
        $region35: #{tpu_custom_call.1} parent=31 // pred_region
          %181 = dma.done %s173, 128
        $region36: #{tpu_custom_call.1} parent=31 // pred_fallthru
          _
        // Predicated region
        $region37: #{tpu_custom_call.1} parent=31 // pred_check
          %p182 = pneg %p63
        $region38: #{tpu_custom_call.1} parent=31 // pred_check_branch
          %184 = sbr.rel (%p182) target = $region40
        $region39: #{tpu_custom_call.1} parent=31 // pred_region
          %186 = dma.done [#allocation6], 512
        $region40: #{tpu_custom_call.1} parent=31 // pred_fallthru
          _
        %s187 = sand.u32 %s29, 1
        %s188 = scalar_lea.sflag [#allocation3], %s187
        %s189 = sand.u32 %s29, 1
        %s190 = smul.addr %s189, 8
        %s191 = scalar_lea.vmem [#allocation2], %s190
        %p192 = pneg %p42
        %p193 = pneg %p39
        %p194 = pneg %p63
        %p195 = pneg %p60
        %p196 = pneg %p84
        %p197 = pneg %p81
        %p198 = pneg %p110
        %p199 = pneg %p107
        %s200 = sand.u32 %s97, 1
        %s201 = scalar_lea.sflag [#allocation4], %s200
        %s202 = sand.u32 %s97, 1
        %s203 = smul.addr %s202, 8
        %s204 = scalar_lea.vmem [#allocation7], %s203
        %v205 = vld [vmem:[%s176] sm:$0xff]
        %v206 = vld [vmem:[#allocation5] sm:$0xff]
        %v207 = vld [vmem:[#allocation5 + $0x8] sm:$0xff]
        %v208 = vld [vmem:[#allocation5 + $0x10] sm:$0xff]
        %v209 = vld [vmem:[#allocation5 + $0x18] sm:$0xff]
        %v210 = vld [vmem:[%s2] sm:$0x1]
        %v212 = vperm.slane %v210, 0
        %vm214 = vcmask 261120
        %v216 = vsel %vm214, %v205, 0
        %218 = vmatpush.msra.mxu0 0.0
        %219 = vmatpush.msra.mxu0 0.0
        %220 = vmatpush.msra.mxu0 0.0
        %221 = vmatpush.msra.mxu0 0.0
        %222 = vmatpush.msra.mxu0 0.0
        %223 = vmatpush.msra.mxu0 0.0
        %224 = vmatpush.msra.mxu0 0.0
        %225 = vmatpush.msra.mxu0 0.0
        %226 = vmatpush.msra.mxu0 0.0
        %227 = vmatpush.msra.mxu0 0.0
        %228 = vmatpush.msra.mxu0 0.0
        %229 = vmatpush.msra.mxu0 0.0
        %230 = vmatpush.msra.mxu0 %v209
        %231 = vmatpush.msra.mxu0 %v208
        %232 = vmatpush.msra.mxu0 %v207
        %233 = vmatpush.msra.mxu0 %v206
        %234 = vmatmul.f32.gmra.mxu0 %v216
        %v235 = vpop.f32.mrf.mxu0
        %v236 = vadd.f32 %v212, %v235
        %237 = vdwg.mxu0
        %238 = vst [vmem:[%s204] sm:$0xff] %v236
        %s239 = sand.u32 %s97, 1
        %s240 = scalar_lea.sflag [#allocation4], %s239
        %s241 = sand.u32 %s97, 1
        %s242 = smul.addr %s241, 8
        %s243 = scalar_lea.vmem [#allocation7], %s242
        // Predicated region
        $region41: #{tpu_custom_call.1} parent=31 // pred_check
          %p244 = pneg %p107
        $region42: #{tpu_custom_call.1} parent=31 // pred_check_branch
          %246 = sbr.rel (%p244) target = $region44
        $region43: #{tpu_custom_call.1} parent=31 // pred_region
          %248 = vsyncadd %s240, 0
          %s249 = smul.addr %s21, 8
          %s250 = scalar_lea.hbm %s3, %s249
          %s252 = sshll.u32 %s243, 4
          %s253 = int_to_ptr.vmem [resolvable:$true] %s252
          %s254 = sshll.u32 %s250, 4
          %s255 = int_to_ptr.hbm [resolvable:$true] %s254
          %257 = dma.vmem_to_hbm [thread:$0]  %s253, 128, %s255, %s240
        $region44: #{tpu_custom_call.1} parent=31 // pred_fallthru
          _
      $region32: #{tpu_custom_call.1} parent=5 // pred_fallthru
        _
      %p258 = scmp.le.s32.totalorder 2, %s16
      // Predicated region
      $region45: #{tpu_custom_call.1} parent=5 // pred_check
        %p259 = pneg %p258
      $region46: #{tpu_custom_call.1} parent=5 // pred_check_branch
        %261 = sbr.rel (%p259) target = $region48
      $region47: #{tpu_custom_call.1} parent=5 // pred_region
        %s262 = ssub.s32 %s16, 2
        // Predicated region
        $region49: #{tpu_custom_call.1} parent=47 // pred_check
          %p263 = pneg %p113
        $region50: #{tpu_custom_call.1} parent=47 // pred_check_branch
          %265 = sbr.rel (%p263) target = $region52
        $region51: #{tpu_custom_call.1} parent=47 // pred_region
          %s266 = sand.u32 %s98, 1
          %s267 = scalar_lea.sflag [#allocation4], %s266
          %s268 = sand.u32 %s98, 1
          %s269 = smul.addr %s268, 8
          %s270 = scalar_lea.vmem [#allocation7], %s269
          %272 = dma.done %s267, 128
        $region52: #{tpu_custom_call.1} parent=47 // pred_fallthru
          _
      $region48: #{tpu_custom_call.1} parent=5 // pred_fallthru
        _
    $region6: #{tpu_custom_call.1} parent=1 // loop_footer
      %s20 = sadd.s32 1, %s16
    $region7: #{tpu_custom_call.1} parent=1 // loop_footer_branch
      %15 = sbr.rel target = $region3
    $region8: #{tpu_custom_call.1} parent=1 // loop_exit
      _
    %273 = vsyncpa [#allocation3], 1
    %s274 = scalar_lea.sflag [#allocation3], 1
    %275 = vsyncpa %s274, 1
    %276 = vsyncpa [#allocation6], 1
    %277 = vsyncpa [#allocation4], 1
    %s278 = scalar_lea.sflag [#allocation4], 1
    %279 = vsyncpa %s278, 1

</llo_original>
